<compile_context>
chip_gen: v5e
topology: v5e:2x2
jax: 0.10.0
libtpu: 0.0.40
codegen_flags: <defaults>
</compile_context>

<pallas_src>
import functools

import jax
import jax.numpy as jnp
from jax import lax
from jax.experimental import pallas as pl
from jax.experimental.pallas import tpu as pltpu


def _round_up(x, m):
    return ((x + m - 1) // m) * m


def _vmem_budget_bytes():
    """Generation-aware (tile budget, scoped vmem limit) in bytes."""
    cap = None
    try:
        cap = getattr(pltpu.get_tpu_info(), "vmem_capacity_bytes", None)
    except Exception:
        cap = None
    if not cap:
        cap = 64 * 1024 * 1024                      # conservative (v7x per-TC)
    budget = min(80 * 1024 * 1024, int(cap * 0.6))  # v5e/v6e ~77 MiB, v7x ~38 MiB
    limit = min(100 * 1024 * 1024, int(cap * 0.85))
    return budget, limit


# ----------------------------- Pallas kernels ------------------------------


def _conv_gemm_kernel(*refs, fuse_relu, compute_stats, apply_bias,
                      use_acc_scratch, single_k, m_valid, tm, mask_rows):
    """K-tiled GEMM; epilogue (bias/stats/relu/cast) only on the last K step."""
    it = iter(refs)
    cols_ref = next(it)
    w_ref = next(it)
    bias_ref = next(it) if apply_bias else None
    out_ref = next(it)
    stats_ref = next(it) if compute_stats else None
    acc_ref = next(it) if use_acc_scratch else None

    def epilogue(acc):
        if apply_bias:
            acc = acc + bias_ref[...]                           # (tm,tn)+(1,tn)
        if compute_stats:
            if mask_rows:
                row = lax.broadcasted_iota(jnp.int32, acc.shape, 0)
                valid = (pl.program_id(0) * tm + row) < m_valid
                acc_s = jnp.where(valid, acc, 0.0)
            else:
                acc_s = acc
            s = jnp.sum(acc_s, axis=0, keepdims=True)            # (1, tn)
            sq = jnp.sum(acc_s * acc_s, axis=0, keepdims=True)   # (1, tn)
            stats_ref[...] = jnp.concatenate([s, sq], axis=0).reshape(
                1, 2, acc.shape[1])
        if fuse_relu:
            acc = jnp.maximum(acc, 0.0)
        out_ref[...] = acc.astype(out_ref.dtype)

    if single_k:
        epilogue(jnp.dot(cols_ref[...], w_ref[...],
                         preferred_element_type=jnp.float32))
        return

    k = pl.program_id(2)
    # f32 accumulation target: the K-resident output block itself when it is
    # f32 (no scratch), otherwise a dedicated f32 VMEM scratch.
    acc_tgt = acc_ref if use_acc_scratch else out_ref

    @pl.when(k == 0)
    def _():
        acc_tgt[...] = jnp.zeros_like(acc_tgt)

    acc_tgt[...] += jnp.dot(cols_ref[...], w_ref[...],
                            preferred_element_type=jnp.float32)

    if apply_bias or compute_stats or fuse_relu or use_acc_scratch:
        @pl.when(k == pl.num_programs(2) - 1)
        def _():
            epilogue(acc_tgt[...])


def _bn_relu_kernel(y_ref, stats_ref, gamma_ref, beta_ref, out_ref, *,
                    count, eps, fuse_relu):
    """Training-mode BatchNorm2d (batch stats, biased variance) + optional ReLU.

    Padded channels carry zero stats -> rsqrt(eps): finite and cropped later.
    """
    y = y_ref[...].astype(jnp.float32)
    inv_count = 1.0 / count
    mean = stats_ref[0:1, :] * inv_count
    var = stats_ref[1:2, :] * inv_count - mean * mean
    inv = lax.rsqrt(var + eps)
    out = (y - mean) * (inv * gamma_ref[...]) + beta_ref[...]
    if fuse_relu:
        out = jnp.maximum(out, 0.0)
    out_ref[...] = out.astype(out_ref.dtype)


# ------------------------------ glue / wrapper ------------------------------


def _im2col(x_nhwc, kh, kw, stride, padding, dilation):
    """(N,H,W,C) -> (N*Ho*Wo, kh*kw*C) patches, zero-padded, row order (kh,kw,cin)."""
    n, h, w, c = x_nhwc.shape
    xp = jnp.pad(x_nhwc, ((0, 0), (padding, padding), (padding, padding), (0, 0)))
    ho = (h + 2 * padding - dilation * (kh - 1) - 1) // stride + 1
    wo = (w + 2 * padding - dilation * (kw - 1) - 1) // stride + 1
    patches = []
    for ih in range(kh):
        for iw in range(kw):
            h0 = ih * dilation
            w0 = iw * dilation
            sl = xp[:, h0:h0 + (ho - 1) * stride + 1:stride,
                       w0:w0 + (wo - 1) * stride + 1:stride, :]
            patches.append(sl)
    cols = jnp.concatenate(patches, axis=-1)          # (N, Ho, Wo, kh*kw*C)
    return cols.reshape(n * ho * wo, kh * kw * c), ho, wo


def _pick_tiles(m, k, cp, budget, out_bytes, needs_acc):
    """Pick (tm, mp, tk, kp, tn) under the VMEM budget."""
    # Contraction tile: lane-dense multiple of 128; tile at 512 when K is large.
    if k <= 1024:
        tk = _round_up(k, 128)
    else:
        tk = 512
    kp = _round_up(k, tk)
    # Cout tile: full padded dim when small, else largest of 512/256/128 dividing it.
    if cp <= 512:
        tn = cp
    else:
        tn = 128
        for cand in (512, 256):
            if cp % cand == 0:
                tn = cand
                break
    # M tile: largest candidate fitting the budget (double-buffered operands).
    tm = 128
    for cand in (2048, 1024, 512, 256, 128):
        need = (2 * cand * tk * 2            # cols (bf16, double-buffered)
                + 2 * tk * tn * 2            # weight (bf16, double-buffered)
                + 2 * cand * tn * out_bytes  # output tiles
                + (cand * tn * 4 if needs_acc else 0))
        if need <= budget:
            tm = cand
            break
    if m < tm:
        tm = max(16, _round_up(m, 16))
    mp = _round_up(m, tm)
    return tm, mp, tk, kp, tn


class BasicConvPallas:
    """Pallas port of model/mfad.py::BasicConv (deterministic synthetic params)."""

    def __init__(self, in_planes, out_planes, kernel_size, stride=1, padding=0,
                 dilation=1, groups=1, relu=False, bn=False, bias=False,
                 key=jax.random.PRNGKey(0)):
        assert groups == 1, "groups > 1 not supported"
        # TODO(synk): grouped convolution (groups > 1) not implemented.
        self.in_planes = in_planes
        self.out_channels = out_planes
        self.kernel_size = int(kernel_size)
        self.stride = stride
        self.padding = padding
        self.dilation = dilation
        self.relu = relu
        self.bn = bn
        self.has_bias = bias
        self.eps = 1e-5

        k = self.kernel_size
        wkey, bkey = jax.random.split(key)
        fan_in = in_planes * k * k
        bound = 1.0 / (fan_in ** 0.5)
        self.weight = jax.random.uniform(
            wkey, (out_planes, in_planes, k, k), jnp.float32, -bound, bound)
        if bias:
            self.conv_bias = jax.random.uniform(
                bkey, (out_planes,), jnp.float32, -bound, bound)
        else:
            self.conv_bias = jnp.zeros((out_planes,), jnp.float32)
        self.gamma = jnp.ones((out_planes,), jnp.float32)
        self.beta = jnp.zeros((out_planes,), jnp.float32)

    def __call__(self, x_nchw):
        n, cin, h, w = x_nchw.shape
        assert cin == self.in_planes
        cout = self.out_channels
        k, s, p, d = self.kernel_size, self.stride, self.padding, self.dilation

        # bf16 before im2col: halves the materialized patch matrix.
        # TODO(synk): fuse im2col into the GEMM (halo-tile DMA) to drop it entirely.
        x_nhwc = jnp.transpose(x_nchw, (0, 2, 3, 1)).astype(jnp.bfloat16)
        cols, ho, wo = _im2col(x_nhwc, k, k, s, p, d)          # (m, kk) bf16
        m, kk = cols.shape

        cp = _round_up(cout, 128)                     # lane-dense output channels
        compute_stats = self.bn
        # bf16 GEMM output when it feeds the (HBM-bound) BN pass or when the
        # 128-lane channel pad is >= 2x the real Cout.
        out_bf16 = self.bn or (2 * cout <= cp)
        out_dtype = jnp.bfloat16 if out_bf16 else jnp.float32
        out_bytes = 2 if out_bf16 else 4

        budget, vmem_limit = _vmem_budget_bytes()
        tm, mp, tk, kp, tn = _pick_tiles(m, kk, cp, budget, out_bytes, out_bf16)
        nm, nn, nk = mp // tm, cp // tn, kp // tk

        # v7x has 2 TensorCores per chip: guarantee >= 2 parallel shards when we can.
        while nm * nn < 2 and tm > 128 and tm % 32 == 0:
            tm //= 2
            mp = _round_up(m, tm)
            nm = mp // tm

        single_k = (nk == 1)
        use_acc_scratch = out_bf16 and not single_k
        # With batch-stat BN the conv bias cancels exactly in normalization.
        apply_bias = self.has_bias and not self.bn
        fuse_relu_in_gemm = self.relu and not self.bn
        mask_rows = compute_stats and (mp != m)

        # Single fused pad (XLA fuses with the im2col concat); bf16 MXU operands.
        cols_p = jnp.pad(cols, ((0, mp - m), (0, kp - kk)))
        w_mat = jnp.transpose(self.weight, (2, 3, 1, 0)).reshape(kk, cout)
        w_p = jnp.pad(w_mat.astype(jnp.bfloat16), ((0, kp - kk), (0, cp - cout)))

        inputs = [cols_p, w_p]
        in_specs = [
            pl.BlockSpec((tm, tk), lambda i, j, kt: (i, kt)),
            pl.BlockSpec((tk, tn), lambda i, j, kt: (kt, j)),
        ]
        if apply_bias:
            bias_p = jnp.pad(self.conv_bias.reshape(1, cout),
                             ((0, 0), (0, cp - cout)))
            inputs.append(bias_p)
            in_specs.append(pl.BlockSpec((1, tn), lambda i, j, kt: (0, j)))

        if compute_stats:
            out_shape = (jax.ShapeDtypeStruct((mp, cp), out_dtype),
                         jax.ShapeDtypeStruct((nm, 2, cp), jnp.float32))
            out_specs = (pl.BlockSpec((tm, tn), lambda i, j, kt: (i, j)),
                         pl.BlockSpec((1, 2, tn), lambda i, j, kt: (i, 0, j)))
        else:
            out_shape = jax.ShapeDtypeStruct((mp, cp), out_dtype)
            out_specs = pl.BlockSpec((tm, tn), lambda i, j, kt: (i, j))

        scratch_shapes = ([pltpu.VMEM((tm, tn), jnp.float32)]
                          if use_acc_scratch else [])

        gemm = pl.pallas_call(
            functools.partial(
                _conv_gemm_kernel, fuse_relu=fuse_relu_in_gemm,
                compute_stats=compute_stats, apply_bias=apply_bias,
                use_acc_scratch=use_acc_scratch, single_k=single_k,
                m_valid=m, tm=tm, mask_rows=mask_rows),
            out_shape=out_shape,
            grid=(nm, nn, nk),
            in_specs=in_specs,
            out_specs=out_specs,
            scratch_shapes=scratch_shapes,
            compiler_params=pltpu.CompilerParams(
                dimension_semantics=("parallel", "parallel", "arbitrary"),
                vmem_limit_bytes=vmem_limit),
        )
        res = gemm(*inputs)

        if compute_stats:
            conv_out, stats_tiles = res
            stats = jnp.sum(stats_tiles, axis=0)          # tiny (2, Cp) reduce
            gamma_p = jnp.pad(self.gamma.reshape(1, cout), ((0, 0), (0, cp - cout)))
            beta_p = jnp.pad(self.beta.reshape(1, cout), ((0, 0), (0, cp - cout)))
            y = pl.pallas_call(
                functools.partial(_bn_relu_kernel, count=float(m),
                                  eps=self.eps, fuse_relu=self.relu),
                out_shape=jax.ShapeDtypeStruct((mp, cp), out_dtype),
                grid=(nm, nn),
                in_specs=[
                    pl.BlockSpec((tm, tn), lambda i, j: (i, j)),
                    pl.BlockSpec((2, tn), lambda i, j: (0, j)),
                    pl.BlockSpec((1, tn), lambda i, j: (0, j)),
                    pl.BlockSpec((1, tn), lambda i, j: (0, j)),
                ],
                out_specs=pl.BlockSpec((tm, tn), lambda i, j: (i, j)),
                input_output_aliases={0: 0},
                compiler_params=pltpu.CompilerParams(
                    dimension_semantics=("parallel", "parallel"),
                    vmem_limit_bytes=vmem_limit),
            )(conv_out, stats, gamma_p, beta_p)
        else:
            y = res

        y = y[:m, :cout].astype(jnp.float32).reshape(n, ho, wo, cout)
        return jnp.transpose(y, (0, 3, 1, 2))              # back to NCHW


# ------------------------------- reference ----------------------------------


def _reference(module, x_nchw):
    w = module.weight
    y = lax.conv_general_dilated(
        x_nchw, w, window_strides=(module.stride, module.stride),
        padding=[(module.padding, module.padding)] * 2,
        rhs_dilation=(module.dilation, module.dilation),
        dimension_numbers=("NCHW", "OIHW", "NCHW"))
    y = y + module.conv_bias[None, :, None, None]
    if module.bn:
        mean = jnp.mean(y, axis=(0, 2, 3), keepdims=True)
        var = jnp.mean((y - mean) ** 2, axis=(0, 2, 3), keepdims=True)
        y = (y - mean) * lax.rsqrt(var + module.eps)
        y = y * module.gamma[None, :, None, None] + module.beta[None, :, None, None]
    if module.relu:
        y = jnp.maximum(y, 0.0)
    return y


# --------------------------------- main --------------------------------------


if __name__ == "__main__":
    key = jax.random.PRNGKey(0)
    xkey, pkey1, pkey2 = jax.random.split(key, 3)
    x = jax.random.normal(xkey, (2, 4, 16, 16), jnp.float32)   # NCHW

    # default-flavor BasicConv: conv only (relu=False, bn=False, bias=False)
    m_plain = BasicConvPallas(4, 8, kernel_size=3, stride=1, padding=1, key=pkey1)
    y_plain = jax.block_until_ready(m_plain(x))
    ref_plain = _reference(m_plain, x)
    assert y_plain.shape == (2, 8, 16, 16)
    assert float(jnp.max(jnp.abs(y_plain - ref_plain))) < 5e-2

    # fully-featured flavor: conv + BatchNorm (batch stats) + ReLU + bias
    m_full = BasicConvPallas(4, 8, kernel_size=3, stride=1, padding=1,
                             relu=True, bn=True, bias=True, key=pkey2)
    y_full = jax.block_until_ready(m_full(x))
    ref_full = _reference(m_full, x)
    assert y_full.shape == (2, 8, 16, 16)
    assert float(jnp.max(jnp.abs(y_full - ref_full))) < 5e-2

    print("KERNEL_OK")
</pallas_src>

<mosaic_0001>
module attributes {stable_mosaic.version = 11 : i64} {
  func.func @_conv_gemm_kernel(%arg0: i32, %arg1: i32, %arg2: i32, %arg3: memref<256x128xbf16, #tpu.memory_space<vmem>>, %arg4: memref<128x128xbf16, #tpu.memory_space<vmem>>, %arg5: memref<256x128xbf16, #tpu.memory_space<vmem>>) attributes {dimension_semantics = [#tpu.dimension_semantics<parallel>, #tpu.dimension_semantics<parallel>, #tpu.dimension_semantics<arbitrary>], iteration_bounds = array<i64: 2, 1, 1>, scalar_prefetch = 0 : i64, scratch_operands = 0 : i64, tpu.core_type = #tpu.core_type<tc>, window_params = [{transform_indices = @transform_0, window_bounds = array<i64: 256, 128>}, {transform_indices = @transform_1, window_bounds = array<i64: 128, 128>}, {transform_indices = @transform_2, window_bounds = array<i64: 256, 128>}]} {
    %c0 = arith.constant 0 : index
    %c0_0 = arith.constant 0 : index
    %0 = vector.load %arg3[%c0, %c0_0] : memref<256x128xbf16, #tpu.memory_space<vmem>>, vector<256x128xbf16>
    %c0_1 = arith.constant 0 : index
    %c0_2 = arith.constant 0 : index
    %1 = vector.load %arg4[%c0_1, %c0_2] : memref<128x128xbf16, #tpu.memory_space<vmem>>, vector<128x128xbf16>
    %cst = arith.constant dense<0.000000e+00> : vector<256x128xf32>
    %2 = tpu.matmul %0, %1, %cst {dimension_numbers = #tpu.dot_dimension_numbers<[1], [0], [0], [1], [0, 0, 1, 1], [], []>} : vector<256x128xbf16>, vector<128x128xbf16>, vector<256x128xf32> -> vector<256x128xf32>
    %3 = arith.truncf %2 : vector<256x128xf32> to vector<256x128xbf16>
    %c0_3 = arith.constant 0 : index
    %c0_4 = arith.constant 0 : index
    %4 = vector.load %arg5[%c0_3, %c0_4] : memref<256x128xbf16, #tpu.memory_space<vmem>>, vector<256x128xbf16>
    tpu.vector_store %arg5[%c0_3, %c0_4], %3 {strides = array<i32>} : memref<256x128xbf16, #tpu.memory_space<vmem>>, vector<256x128xbf16>,
    return
  }
  func.func @transform_0(%arg0: i32, %arg1: i32, %arg2: i32) -> (i32, i32) {
    %c0_i32 = arith.constant 0 : i32
    return %arg0, %arg2 : i32, i32
  }
  func.func @transform_1(%arg0: i32, %arg1: i32, %arg2: i32) -> (i32, i32) {
    %c0_i32 = arith.constant 0 : i32
    return %arg2, %arg1 : i32, i32
  }
  func.func @transform_2(%arg0: i32, %arg1: i32, %arg2: i32) -> (i32, i32) {
    %c0_i32 = arith.constant 0 : i32
    return %arg0, %arg1 : i32, i32
  }
}

</mosaic_0001>

<llo_original>
// kernel: tpu_custom_call.1
$region0: #{tpu_custom_call.1}
  #allocation0 [shape = 'u32[]', space=smem, size = 0x4, offset = 0x4, fixed_abs, tag = 'smem constant byte address 0x4 - core index']
  #allocation1 [shape = 'u32[72,128]{1,0:T(1,128)}', space=vmem, size = 0x9000, scoped, tag = 'internal scratch']
  %s0 = inlined_call_operand.hbm [shape: bf16[512,128], index: 0, kind: input, shape index: {}]
  %s1 = inlined_call_operand.hbm [shape: bf16[128,128], index: 1, kind: input, shape index: {}]
  %s2 = inlined_call_operand.hbm [shape: bf16[512,128], index: 2, kind: output, shape index: {}]
  %s3 = sld [smem:[#allocation0]]
  $region49: #{tpu_custom_call.1} parent=0
    _
  %s5 = ssub.s32 1, %s3
  %s6 = scalar_select 0, %s5, %s3
  $region1: #{tpu_custom_call.1} parent=0
    #allocation2 [shape = 'u8[131072]{0}', space=vmem, size = 0x20000, scoped, tag = 'input window, operand 0']
    #allocation3 [shape = 's32[2]{0}', space=sflag, size = 0x8, scoped, tag = 'scoped memory for tpu_custom_call.1']
    #allocation4 [shape = 's32[2]{0}', space=sflag, size = 0x8, scoped, tag = 'scoped memory for tpu_custom_call.1']
    #allocation5 [shape = 'u8[32768]{0}', space=vmem, size = 0x8000, scoped, tag = 'input window, operand 1, single buffered']
    #allocation6 [shape = 's32[1]{0}', space=sflag, size = 0x4, scoped, tag = 'scoped memory for tpu_custom_call.1']
    #allocation7 [shape = 'u8[131072]{0}', space=vmem, size = 0x20000, scoped, tag = 'output window, operand 0']
    %7 = vsyncpa [#allocation3], 0
    %s8 = scalar_lea.sflag [#allocation3], 1
    %9 = vsyncpa %s8, 0
    %10 = vsyncpa [#allocation6], 0
    %11 = vsyncpa [#allocation4], 0
    %s12 = scalar_lea.sflag [#allocation4], 1
    %13 = vsyncpa %s12, 0
    loop: start=0, step=1, limit=4
    $region2: #{tpu_custom_call.1} parent=1 // loop_pre_header
      _
    $region3: #{tpu_custom_call.1} parent=1 // loop_header
      %s15 = sphi 0, %s19
      %p16 = scmp.ge.s32.totalorder %s15, 4
      %s22 = sphi 0, %s41
      %s23 = sphi 0, %s37
      %s24 = sphi 0, %s33
      %s25 = sphi 0, %s22
      %s26 = sphi 0, %s23
      %s27 = sphi 0, %s24
      %s28 = sphi 0, %s25
      %s29 = sphi 0, %s26
      %s30 = sphi 0, %s27
      %s46 = sphi 0, %s48
      %s49 = sphi 0, %s46
      %s50 = sphi 0, %s49
      %s66 = sphi 0, %s50
      %s74 = sphi 0, %s76
      %s77 = sphi 0, %s74
      %s78 = sphi 0, %s77
      %s94 = sphi 0, %s78
      %s102 = sphi 0, %s104
      %s105 = sphi 0, %s102
      %s106 = sphi 0, %s105
      %s122 = sphi 0, %s106
    $region4: #{tpu_custom_call.1} parent=1 // loop_header_branch
      %18 = sbr.rel (%p16) target = $region8
    $region5: #{tpu_custom_call.1} parent=1 // loop_body
      %s20 = ssub.s32 %s15, 1
      %s21 = ssub.s32 %s15, 2
      %s31 = sadd.s32 1, %s24
      %p32 = scmp.ge.s32.totalorder %s31, 1
      %s33 = scalar_select %p32, 0, %s31
      %s34 = sadd.s32 1, %s23
      %s35 = scalar_select %p32, %s34, %s23
      %p36 = scmp.ge.s32.totalorder %s35, 1
      %s37 = scalar_select %p36, 0, %s35
      %s38 = sadd.s32 1, %s22
      %s39 = scalar_select %p36, %s38, %s22
      %p40 = scmp.ge.s32.totalorder %s39, 2
      %s41 = scalar_select %p40, 0, %s39
      %s42 = ssub.s32 %s22, %s41
      %s43 = ssub.s32 %s24, %s33
      %s44 = sor.u32 %s42, %s43
      %p45 = scmp.eq.s32.totalorder %s44, 0
      %s47 = sadd.s32 %s46, 1
      %s48 = scalar_select %p45, %s46, %s47
      %p51 = pneg %p45
      %p52 = scmp.eq.s32.totalorder %s15, 1
      %p53 = por %p51, %p52
      %p54 = scmp.ne.s32.totalorder %s46, %s49
      %p55 = scmp.eq.s32.totalorder %s15, 0
      %p56 = por %p54, %p55
      %p57 = scmp.ne.s32.totalorder %s46, %s49
      %p58 = scmp.eq.s32.totalorder %s20, 1
      %p59 = por %p57, %p58
      %p60 = scmp.ne.s32.totalorder %s49, %s50
      %p61 = scmp.eq.s32.totalorder %s20, 0
      %p62 = por %p60, %p61
      %p63 = scmp.ne.s32.totalorder %s49, %s50
      %p64 = scmp.eq.s32.totalorder %s21, 1
      %p65 = por %p63, %p64
      %p67 = scmp.ne.s32.totalorder %s50, %s66
      %p68 = scmp.eq.s32.totalorder %s21, 0
      %p69 = por %p67, %p68
      %s70 = ssub.s32 %s24, %s33
      %s71 = ssub.s32 %s23, %s37
      %s72 = sor.u32 %s70, %s71
      %p73 = scmp.eq.s32.totalorder %s72, 0
      %s75 = sadd.s32 %s74, 1
      %s76 = scalar_select %p73, %s74, %s75
      %p79 = pneg %p73
      %p80 = scmp.eq.s32.totalorder %s15, 1
      %p81 = por %p79, %p80
      %p82 = scmp.ne.s32.totalorder %s74, %s77
      %p83 = scmp.eq.s32.totalorder %s15, 0
      %p84 = por %p82, %p83
      %p85 = scmp.ne.s32.totalorder %s74, %s77
      %p86 = scmp.eq.s32.totalorder %s20, 1
      %p87 = por %p85, %p86
      %p88 = scmp.ne.s32.totalorder %s77, %s78
      %p89 = scmp.eq.s32.totalorder %s20, 0
      %p90 = por %p88, %p89
      %p91 = scmp.ne.s32.totalorder %s77, %s78
      %p92 = scmp.eq.s32.totalorder %s21, 1
      %p93 = por %p91, %p92
      %p95 = scmp.ne.s32.totalorder %s78, %s94
      %p96 = scmp.eq.s32.totalorder %s21, 0
      %p97 = por %p95, %p96
      %s98 = ssub.s32 %s22, %s41
      %s99 = ssub.s32 %s23, %s37
      %s100 = sor.u32 %s98, %s99
      %p101 = scmp.eq.s32.totalorder %s100, 0
      %s103 = sadd.s32 %s102, 1
      %s104 = scalar_select %p101, %s102, %s103
      %p107 = pneg %p101
      %p108 = scmp.eq.s32.totalorder %s15, 1
      %p109 = por %p107, %p108
      %p110 = scmp.ne.s32.totalorder %s102, %s105
      %p111 = scmp.eq.s32.totalorder %s15, 0
      %p112 = por %p110, %p111
      %p113 = scmp.ne.s32.totalorder %s102, %s105
      %p114 = scmp.eq.s32.totalorder %s20, 1
      %p115 = por %p113, %p114
      %p116 = scmp.ne.s32.totalorder %s105, %s106
      %p117 = scmp.eq.s32.totalorder %s20, 0
      %p118 = por %p116, %p117
      %p119 = scmp.ne.s32.totalorder %s105, %s106
      %p120 = scmp.eq.s32.totalorder %s21, 1
      %p121 = por %p119, %p120
      %p123 = scmp.ne.s32.totalorder %s106, %s122
      %p124 = scmp.eq.s32.totalorder %s21, 0
      %p125 = por %p123, %p124
      %p126 = scmp.le.s32.totalorder 1, %s15
      %p127 = scmp.lt.s32.totalorder %s15, 3
      %p128 = pnand %p126, %p127
      %p129 = pneg %p128
      // Predicated region
      $region9: #{tpu_custom_call.1} parent=5 // pred_check
        _
      $region10: #{tpu_custom_call.1} parent=5 // pred_check_branch
        %131 = sbr.rel (%p128) target = $region12
      $region11: #{tpu_custom_call.1} parent=5 // pred_region
        %s132 = ssub.s32 %s15, 1
        // Predicated region
        $region13: #{tpu_custom_call.1} parent=11 // pred_check
          %p133 = pneg %p90
        $region14: #{tpu_custom_call.1} parent=11 // pred_check_branch
          %135 = sbr.rel (%p133) target = $region16
        $region15: #{tpu_custom_call.1} parent=11 // pred_region
          %s136 = smul.u32 16, %s27
          %138 = vsyncadd [#allocation6], 0
          %s139 = sadd.s32 %s26, %s136
          %s140 = smul.addr %s139, 4
          %s141 = scalar_lea.hbm %s1, %s140
          %s142 = sshll.u32 %s141, 4
          %s143 = int_to_ptr.hbm [resolvable:$true] %s142
          %s144 = sshll.u32 [#allocation5], 4
          %s145 = int_to_ptr.vmem [resolvable:$true] %s144
          %150 = dma.hbm_to_vmem [thread:$0]  %s143, 1024, %s145, [#allocation6], 64, 64, 4
        $region16: #{tpu_custom_call.1} parent=11 // pred_fallthru
          _
      $region12: #{tpu_custom_call.1} parent=5 // pred_fallthru
        _
      %p151 = scmp.lt.s32.totalorder %s15, 2
      // Predicated region
      $region17: #{tpu_custom_call.1} parent=5 // pred_check
        %p152 = pneg %p151
      $region18: #{tpu_custom_call.1} parent=5 // pred_check_branch
        %154 = sbr.rel (%p152) target = $region20
      $region19: #{tpu_custom_call.1} parent=5 // pred_region
        // Predicated region
        $region21: #{tpu_custom_call.1} parent=19 // pred_check
          %p155 = pneg %p56
        $region22: #{tpu_custom_call.1} parent=19 // pred_check_branch
          %157 = sbr.rel (%p155) target = $region24
        $region23: #{tpu_custom_call.1} parent=19 // pred_region
          %s158 = sand.u32 %s46, 1
          %s159 = scalar_lea.sflag [#allocation3], %s158
          %s160 = sand.u32 %s46, 1
          %s161 = smul.addr %s160, 128
          %s162 = scalar_lea.vmem [#allocation2], %s161
          %s163 = smul.u32 32, %s22
          %165 = vsyncadd %s159, 0
          %s166 = sadd.s32 %s24, %s163
          %s167 = smul.addr %s166, 4
          %s168 = scalar_lea.hbm %s0, %s167
          %s169 = sshll.u32 %s168, 4
          %s170 = int_to_ptr.hbm [resolvable:$true] %s169
          %s171 = sshll.u32 %s162, 4
          %s172 = int_to_ptr.vmem [resolvable:$true] %s171
          %177 = dma.hbm_to_vmem [thread:$0]  %s170, 2048, %s172, %s159, 64, 64, 4
        $region24: #{tpu_custom_call.1} parent=19 // pred_fallthru
          _
      $region20: #{tpu_custom_call.1} parent=5 // pred_fallthru
        _
      %p178 = scmp.le.s32.totalorder 1, %s15
      %p179 = scmp.lt.s32.totalorder %s15, 3
      %p180 = pnand %p178, %p179
      %p181 = pneg %p180
      // Predicated region
      $region25: #{tpu_custom_call.1} parent=5 // pred_check
        _
      $region26: #{tpu_custom_call.1} parent=5 // pred_check_branch
        %183 = sbr.rel (%p180) target = $region28
      $region27: #{tpu_custom_call.1} parent=5 // pred_region
        %s184 = ssub.s32 %s15, 1
        %s185 = sand.u32 %s49, 1
        %s186 = scalar_lea.sflag [#allocation3], %s185
        %s187 = sand.u32 %s49, 1
        %s188 = smul.addr %s187, 128
        %s189 = scalar_lea.vmem [#allocation2], %s188
        // Predicated region
        $region29: #{tpu_custom_call.1} parent=27 // pred_check
          %p190 = pneg %p62
        $region30: #{tpu_custom_call.1} parent=27 // pred_check_branch
          %192 = sbr.rel (%p190) target = $region32
        $region31: #{tpu_custom_call.1} parent=27 // pred_region
          %194 = dma.done %s186, 2048
        $region32: #{tpu_custom_call.1} parent=27 // pred_fallthru
          _
        // Predicated region
        $region33: #{tpu_custom_call.1} parent=27 // pred_check
          %p195 = pneg %p90
        $region34: #{tpu_custom_call.1} parent=27 // pred_check_branch
          %197 = sbr.rel (%p195) target = $region36
        $region35: #{tpu_custom_call.1} parent=27 // pred_region
          %199 = dma.done [#allocation6], 1024
        $region36: #{tpu_custom_call.1} parent=27 // pred_fallthru
          _
        %s200 = sand.u32 %s49, 1
        %s201 = scalar_lea.sflag [#allocation3], %s200
        %s202 = sand.u32 %s49, 1
        %s203 = smul.addr %s202, 128
        %s204 = scalar_lea.vmem [#allocation2], %s203
        %p205 = pneg %p62
        %p206 = pneg %p59
        %p207 = pneg %p90
        %p208 = pneg %p87
        %p209 = pneg %p118
        %p210 = pneg %p115
        %s211 = sand.u32 %s105, 1
        %s212 = scalar_lea.sflag [#allocation4], %s211
        %s213 = sand.u32 %s105, 1
        %s214 = smul.addr %s213, 128
        %s215 = scalar_lea.vmem [#allocation7], %s214
        %s216 = smul.u32 32, %s25
        %s217 = smul.u32 16, %s27
        %s218 = smul.u32 32, %s25
        %v219 = vld [vmem:[%s189] sm:$0xf]
        %v220 = vld [vmem:[%s189 + $0x4] sm:$0xf]
        %v221 = vld [vmem:[%s189 + $0x8] sm:$0xf]
        %v222 = vld [vmem:[%s189 + $0xc] sm:$0xf]
        %v223 = vld [vmem:[%s189 + $0x10] sm:$0xf]
        %v224 = vld [vmem:[%s189 + $0x14] sm:$0xf]
        %v225 = vld [vmem:[%s189 + $0x18] sm:$0xf]
        %v226 = vld [vmem:[%s189 + $0x1c] sm:$0xf]
        %v227 = vld [vmem:[%s189 + $0x20] sm:$0xf]
        %v228 = vld [vmem:[%s189 + $0x24] sm:$0xf]
        %v229 = vld [vmem:[%s189 + $0x28] sm:$0xf]
        %v230 = vld [vmem:[%s189 + $0x2c] sm:$0xf]
        %v231 = vld [vmem:[%s189 + $0x30] sm:$0xf]
        %v232 = vld [vmem:[%s189 + $0x34] sm:$0xf]
        %v233 = vld [vmem:[%s189 + $0x38] sm:$0xf]
        %v234 = vld [vmem:[%s189 + $0x3c] sm:$0xf]
        %v235 = vld [vmem:[%s189 + $0x40] sm:$0xf]
        %v236 = vld [vmem:[%s189 + $0x44] sm:$0xf]
        %v237 = vld [vmem:[%s189 + $0x48] sm:$0xf]
        %v238 = vld [vmem:[%s189 + $0x4c] sm:$0xf]
        %v239 = vld [vmem:[%s189 + $0x50] sm:$0xf]
        %v240 = vld [vmem:[%s189 + $0x54] sm:$0xf]
        %v241 = vld [vmem:[%s189 + $0x58] sm:$0xf]
        %v242 = vld [vmem:[%s189 + $0x5c] sm:$0xf]
        %v243 = vld [vmem:[%s189 + $0x60] sm:$0xf]
        %v244 = vld [vmem:[%s189 + $0x64] sm:$0xf]
        %v245 = vld [vmem:[%s189 + $0x68] sm:$0xf]
        %v246 = vld [vmem:[%s189 + $0x6c] sm:$0xf]
        %v247 = vld [vmem:[%s189 + $0x70] sm:$0xf]
        %v248 = vld [vmem:[%s189 + $0x74] sm:$0xf]
        %v249 = vld [vmem:[%s189 + $0x78] sm:$0xf]
        %v250 = vld [vmem:[%s189 + $0x7c] sm:$0xf]
        %v251 = vld [vmem:[#allocation5] sm:$0xf]
        %v252 = vld [vmem:[#allocation5 + $0x4] sm:$0xf]
        %v253 = vld [vmem:[#allocation5 + $0x8] sm:$0xf]
        %v254 = vld [vmem:[#allocation5 + $0xc] sm:$0xf]
        %v255 = vld [vmem:[#allocation5 + $0x10] sm:$0xf]
        %v256 = vld [vmem:[#allocation5 + $0x14] sm:$0xf]
        %v257 = vld [vmem:[#allocation5 + $0x18] sm:$0xf]
        %v258 = vld [vmem:[#allocation5 + $0x1c] sm:$0xf]
        %v259 = vld [vmem:[#allocation5 + $0x20] sm:$0xf]
        %v260 = vld [vmem:[#allocation5 + $0x24] sm:$0xf]
        %v261 = vld [vmem:[#allocation5 + $0x28] sm:$0xf]
        %v262 = vld [vmem:[#allocation5 + $0x2c] sm:$0xf]
        %v263 = vld [vmem:[#allocation5 + $0x30] sm:$0xf]
        %v264 = vld [vmem:[#allocation5 + $0x34] sm:$0xf]
        %v265 = vld [vmem:[#allocation5 + $0x38] sm:$0xf]
        %v266 = vld [vmem:[#allocation5 + $0x3c] sm:$0xf]
        %v299 = vunpack.c.l.b16 %v219
        %v300 = vunpack.c.l.b16 %v220
        %v301 = vunpack.c.l.b16 %v221
        %v302 = vunpack.c.l.b16 %v222
        %v303 = vunpack.c.l.b16 %v223
        %v304 = vunpack.c.l.b16 %v224
        %v305 = vunpack.c.l.b16 %v225
        %v306 = vunpack.c.l.b16 %v226
        %v307 = vunpack.c.l.b16 %v227
        %v308 = vunpack.c.l.b16 %v228
        %v309 = vunpack.c.l.b16 %v229
        %v310 = vunpack.c.l.b16 %v230
        %v311 = vunpack.c.l.b16 %v231
        %v312 = vunpack.c.l.b16 %v232
        %v313 = vunpack.c.l.b16 %v233
        %v314 = vunpack.c.l.b16 %v234
        %v315 = vunpack.c.l.b16 %v235
        %v316 = vunpack.c.l.b16 %v236
        %v317 = vunpack.c.l.b16 %v237
        %v318 = vunpack.c.l.b16 %v238
        %v319 = vunpack.c.l.b16 %v239
        %v320 = vunpack.c.l.b16 %v240
        %v321 = vunpack.c.l.b16 %v241
        %v322 = vunpack.c.l.b16 %v242
        %v323 = vunpack.c.l.b16 %v243
        %v324 = vunpack.c.l.b16 %v244
        %v325 = vunpack.c.l.b16 %v245
        %v326 = vunpack.c.l.b16 %v246
        %v327 = vunpack.c.l.b16 %v247
        %v328 = vunpack.c.l.b16 %v248
        %v329 = vunpack.c.l.b16 %v249
        %v330 = vunpack.c.l.b16 %v250
        %v331 = vpack.c.b16 %v300, %v299
        %v332 = vpack.c.b16 %v302, %v301
        %v333 = vpack.c.b16 %v304, %v303
        %v334 = vpack.c.b16 %v306, %v305
        %v335 = vpack.c.b16 %v308, %v307
        %v336 = vpack.c.b16 %v310, %v309
        %v337 = vpack.c.b16 %v312, %v311
        %v338 = vpack.c.b16 %v314, %v313
        %v339 = vpack.c.b16 %v316, %v315
        %v340 = vpack.c.b16 %v318, %v317
        %v341 = vpack.c.b16 %v320, %v319
        %v342 = vpack.c.b16 %v322, %v321
        %v343 = vpack.c.b16 %v324, %v323
        %v344 = vpack.c.b16 %v326, %v325
        %v345 = vpack.c.b16 %v328, %v327
        %v346 = vpack.c.b16 %v330, %v329
        %v379 = vunpack.c.l.b16 %v251
        %v380 = vunpack.c.l.b16 %v252
        %v381 = vunpack.c.l.b16 %v253
        %v382 = vunpack.c.l.b16 %v254
        %v383 = vunpack.c.l.b16 %v255
        %v384 = vunpack.c.l.b16 %v256
        %v385 = vunpack.c.l.b16 %v257
        %v386 = vunpack.c.l.b16 %v258
        %v387 = vunpack.c.l.b16 %v259
        %v388 = vunpack.c.l.b16 %v260
        %v389 = vunpack.c.l.b16 %v261
        %v390 = vunpack.c.l.b16 %v262
        %v391 = vunpack.c.l.b16 %v263
        %v392 = vunpack.c.l.b16 %v264
        %v393 = vunpack.c.l.b16 %v265
        %v394 = vunpack.c.l.b16 %v266
        %v395 = vpack.c.b16 %v380, %v379
        %v396 = vpack.c.b16 %v382, %v381
        %v397 = vpack.c.b16 %v384, %v383
        %v398 = vpack.c.b16 %v386, %v385
        %v399 = vpack.c.b16 %v388, %v387
        %v400 = vpack.c.b16 %v390, %v389
        %v401 = vpack.c.b16 %v392, %v391
        %v402 = vpack.c.b16 %v394, %v393
        %411 = vmatpush.bf16.msra.mxu0 %v402
        %412 = vmatpush.bf16.msra.mxu0 %v401
        %413 = vmatpush.bf16.msra.mxu0 %v400
        %414 = vmatpush.bf16.msra.mxu0 %v399
        %415 = vmatpush.bf16.msra.mxu0 %v398
        %416 = vmatpush.bf16.msra.mxu0 %v397
        %417 = vmatpush.bf16.msra.mxu0 %v396
        %418 = vmatpush.bf16.msra.mxu0 %v395
        %419 = vmatmul.bf16.gmra.mxu0 %v331
        %v420 = vpop.f32.mrf.mxu0
        %v421 = vadd.f32 0.0, %v420
        %v422 = vpop.f32.mrf.mxu0
        %v423 = vadd.f32 0.0, %v422
        %424 = vmatmul.bf16.gmra.mxu0 %v332
        %v425 = vpop.f32.mrf.mxu0
        %v426 = vadd.f32 0.0, %v425
        %v427 = vpop.f32.mrf.mxu0
        %v428 = vadd.f32 0.0, %v427
        %429 = vmatmul.bf16.gmra.mxu0 %v333
        %v430 = vpop.f32.mrf.mxu0
        %v431 = vadd.f32 0.0, %v430
        %v432 = vpop.f32.mrf.mxu0
        %v433 = vadd.f32 0.0, %v432
        %434 = vmatmul.bf16.gmra.mxu0 %v334
        %v435 = vpop.f32.mrf.mxu0
        %v436 = vadd.f32 0.0, %v435
        %v437 = vpop.f32.mrf.mxu0
        %v438 = vadd.f32 0.0, %v437
        %439 = vmatmul.bf16.gmra.mxu0 %v335
        %v440 = vpop.f32.mrf.mxu0
        %v441 = vadd.f32 0.0, %v440
        %v442 = vpop.f32.mrf.mxu0
        %v443 = vadd.f32 0.0, %v442
        %444 = vmatmul.bf16.gmra.mxu0 %v336
        %v445 = vpop.f32.mrf.mxu0
        %v446 = vadd.f32 0.0, %v445
        %v447 = vpop.f32.mrf.mxu0
        %v448 = vadd.f32 0.0, %v447
        %449 = vmatmul.bf16.gmra.mxu0 %v337
        %v450 = vpop.f32.mrf.mxu0
        %v451 = vadd.f32 0.0, %v450
        %v452 = vpop.f32.mrf.mxu0
        %v453 = vadd.f32 0.0, %v452
        %454 = vmatmul.bf16.gmra.mxu0 %v338
        %v455 = vpop.f32.mrf.mxu0
        %v456 = vadd.f32 0.0, %v455
        %v457 = vpop.f32.mrf.mxu0
        %v458 = vadd.f32 0.0, %v457
        %459 = vmatmul.bf16.gmra.mxu0 %v339
        %v460 = vpop.f32.mrf.mxu0
        %v461 = vadd.f32 0.0, %v460
        %v462 = vpop.f32.mrf.mxu0
        %v463 = vadd.f32 0.0, %v462
        %464 = vmatmul.bf16.gmra.mxu0 %v340
        %v465 = vpop.f32.mrf.mxu0
        %v466 = vadd.f32 0.0, %v465
        %v467 = vpop.f32.mrf.mxu0
        %v468 = vadd.f32 0.0, %v467
        %469 = vmatmul.bf16.gmra.mxu0 %v341
        %v470 = vpop.f32.mrf.mxu0
        %v471 = vadd.f32 0.0, %v470
        %v472 = vpop.f32.mrf.mxu0
        %v473 = vadd.f32 0.0, %v472
        %474 = vmatmul.bf16.gmra.mxu0 %v342
        %v475 = vpop.f32.mrf.mxu0
        %v476 = vadd.f32 0.0, %v475
        %v477 = vpop.f32.mrf.mxu0
        %v478 = vadd.f32 0.0, %v477
        %479 = vmatmul.bf16.gmra.mxu0 %v343
        %v480 = vpop.f32.mrf.mxu0
        %v481 = vadd.f32 0.0, %v480
        %v482 = vpop.f32.mrf.mxu0
        %v483 = vadd.f32 0.0, %v482
        %484 = vmatmul.bf16.gmra.mxu0 %v344
        %v485 = vpop.f32.mrf.mxu0
        %v486 = vadd.f32 0.0, %v485
        %v487 = vpop.f32.mrf.mxu0
        %v488 = vadd.f32 0.0, %v487
        %489 = vmatmul.bf16.gmra.mxu0 %v345
        %v490 = vpop.f32.mrf.mxu0
        %v491 = vadd.f32 0.0, %v490
        %v492 = vpop.f32.mrf.mxu0
        %v493 = vadd.f32 0.0, %v492
        %494 = vmatmul.bf16.gmra.mxu0 %v346
        %v495 = vpop.f32.mrf.mxu0
        %v496 = vadd.f32 0.0, %v495
        %v497 = vpop.f32.mrf.mxu0
        %v498 = vadd.f32 0.0, %v497
        %499 = vdwg.mxu0
        %v500 = vpack.c.bf16 %v421, %v421
        %v501 = vpack.c.bf16 %v423, %v423
        %v502 = vpack.c.bf16 %v426, %v426
        %v503 = vpack.c.bf16 %v428, %v428
        %v504 = vpack.c.bf16 %v431, %v431
        %v505 = vpack.c.bf16 %v433, %v433
        %v506 = vpack.c.bf16 %v436, %v436
        %v507 = vpack.c.bf16 %v438, %v438
        %v508 = vpack.c.bf16 %v441, %v441
        %v509 = vpack.c.bf16 %v443, %v443
        %v510 = vpack.c.bf16 %v446, %v446
        %v511 = vpack.c.bf16 %v448, %v448
        %v512 = vpack.c.bf16 %v451, %v451
        %v513 = vpack.c.bf16 %v453, %v453
        %v514 = vpack.c.bf16 %v456, %v456
        %v515 = vpack.c.bf16 %v458, %v458
        %v516 = vpack.c.bf16 %v461, %v461
        %v517 = vpack.c.bf16 %v463, %v463
        %v518 = vpack.c.bf16 %v466, %v466
        %v519 = vpack.c.bf16 %v468, %v468
        %v520 = vpack.c.bf16 %v471, %v471
        %v521 = vpack.c.bf16 %v473, %v473
        %v522 = vpack.c.bf16 %v476, %v476
        %v523 = vpack.c.bf16 %v478, %v478
        %v524 = vpack.c.bf16 %v481, %v481
        %v525 = vpack.c.bf16 %v483, %v483
        %v526 = vpack.c.bf16 %v486, %v486
        %v527 = vpack.c.bf16 %v488, %v488
        %v528 = vpack.c.bf16 %v491, %v491
        %v529 = vpack.c.bf16 %v493, %v493
        %v530 = vpack.c.bf16 %v496, %v496
        %v531 = vpack.c.bf16 %v498, %v498
        %532 = vst [vmem:[%s215] sm:$0xf] %v500
        %533 = vst [vmem:[%s215 + $0x4] sm:$0xf] %v501
        %534 = vst [vmem:[%s215 + $0x8] sm:$0xf] %v502
        %535 = vst [vmem:[%s215 + $0xc] sm:$0xf] %v503
        %536 = vst [vmem:[%s215 + $0x10] sm:$0xf] %v504
        %537 = vst [vmem:[%s215 + $0x14] sm:$0xf] %v505
        %538 = vst [vmem:[%s215 + $0x18] sm:$0xf] %v506
        %539 = vst [vmem:[%s215 + $0x1c] sm:$0xf] %v507
        %540 = vst [vmem:[%s215 + $0x20] sm:$0xf] %v508
        %541 = vst [vmem:[%s215 + $0x24] sm:$0xf] %v509
        %542 = vst [vmem:[%s215 + $0x28] sm:$0xf] %v510
        %543 = vst [vmem:[%s215 + $0x2c] sm:$0xf] %v511
        %544 = vst [vmem:[%s215 + $0x30] sm:$0xf] %v512
        %545 = vst [vmem:[%s215 + $0x34] sm:$0xf] %v513
        %546 = vst [vmem:[%s215 + $0x38] sm:$0xf] %v514
        %547 = vst [vmem:[%s215 + $0x3c] sm:$0xf] %v515
        %548 = vst [vmem:[%s215 + $0x40] sm:$0xf] %v516
        %549 = vst [vmem:[%s215 + $0x44] sm:$0xf] %v517
        %550 = vst [vmem:[%s215 + $0x48] sm:$0xf] %v518
        %551 = vst [vmem:[%s215 + $0x4c] sm:$0xf] %v519
        %552 = vst [vmem:[%s215 + $0x50] sm:$0xf] %v520
        %553 = vst [vmem:[%s215 + $0x54] sm:$0xf] %v521
        %554 = vst [vmem:[%s215 + $0x58] sm:$0xf] %v522
        %555 = vst [vmem:[%s215 + $0x5c] sm:$0xf] %v523
        %556 = vst [vmem:[%s215 + $0x60] sm:$0xf] %v524
        %557 = vst [vmem:[%s215 + $0x64] sm:$0xf] %v525
        %558 = vst [vmem:[%s215 + $0x68] sm:$0xf] %v526
        %559 = vst [vmem:[%s215 + $0x6c] sm:$0xf] %v527
        %560 = vst [vmem:[%s215 + $0x70] sm:$0xf] %v528
        %561 = vst [vmem:[%s215 + $0x74] sm:$0xf] %v529
        %562 = vst [vmem:[%s215 + $0x78] sm:$0xf] %v530
        %563 = vst [vmem:[%s215 + $0x7c] sm:$0xf] %v531
        %s564 = sand.u32 %s105, 1
        %s565 = scalar_lea.sflag [#allocation4], %s564
        %s566 = sand.u32 %s105, 1
        %s567 = smul.addr %s566, 128
        %s568 = scalar_lea.vmem [#allocation7], %s567
        // Predicated region
        $region37: #{tpu_custom_call.1} parent=27 // pred_check
          %p569 = pneg %p115
        $region38: #{tpu_custom_call.1} parent=27 // pred_check_branch
          %571 = sbr.rel (%p569) target = $region40
        $region39: #{tpu_custom_call.1} parent=27 // pred_region
          %s572 = smul.u32 32, %s25
          %574 = vsyncadd %s565, 0
          %s575 = sadd.s32 %s26, %s572
          %s576 = smul.addr %s575, 4
          %s577 = scalar_lea.hbm %s2, %s576
          %s578 = sshll.u32 %s568, 4
          %s579 = int_to_ptr.vmem [resolvable:$true] %s578
          %s580 = sshll.u32 %s577, 4
          %s581 = int_to_ptr.hbm [resolvable:$true] %s580
          %586 = dma.vmem_to_hbm [thread:$0]  %s579, 2048, %s581, %s565, 64, 64, 4
        $region40: #{tpu_custom_call.1} parent=27 // pred_fallthru
          _
      $region28: #{tpu_custom_call.1} parent=5 // pred_fallthru
        _
      %p587 = scmp.le.s32.totalorder 2, %s15
      // Predicated region
      $region41: #{tpu_custom_call.1} parent=5 // pred_check
        %p588 = pneg %p587
      $region42: #{tpu_custom_call.1} parent=5 // pred_check_branch
        %590 = sbr.rel (%p588) target = $region44
      $region43: #{tpu_custom_call.1} parent=5 // pred_region
        %s591 = ssub.s32 %s15, 2
        // Predicated region
        $region45: #{tpu_custom_call.1} parent=43 // pred_check
          %p592 = pneg %p121
        $region46: #{tpu_custom_call.1} parent=43 // pred_check_branch
          %594 = sbr.rel (%p592) target = $region48
        $region47: #{tpu_custom_call.1} parent=43 // pred_region
          %s595 = sand.u32 %s106, 1
          %s596 = scalar_lea.sflag [#allocation4], %s595
          %s597 = sand.u32 %s106, 1
          %s598 = smul.addr %s597, 128
          %s599 = scalar_lea.vmem [#allocation7], %s598
          %601 = dma.done %s596, 2048
        $region48: #{tpu_custom_call.1} parent=43 // pred_fallthru
          _
      $region44: #{tpu_custom_call.1} parent=5 // pred_fallthru
        _
    $region6: #{tpu_custom_call.1} parent=1 // loop_footer
      %s19 = sadd.s32 1, %s15
    $region7: #{tpu_custom_call.1} parent=1 // loop_footer_branch
      %14 = sbr.rel target = $region3
    $region8: #{tpu_custom_call.1} parent=1 // loop_exit
      _
    %602 = vsyncpa [#allocation3], 1
    %s603 = scalar_lea.sflag [#allocation3], 1
    %604 = vsyncpa %s603, 1
    %605 = vsyncpa [#allocation6], 1
    %606 = vsyncpa [#allocation4], 1
    %s607 = scalar_lea.sflag [#allocation4], 1
    %608 = vsyncpa %s607, 1

</llo_original>
